<compile_context>
chip_gen: v7x
topology: tpu7x:2x2x1
jax: 0.10.0
libtpu: 0.0.40
codegen_flags: <defaults>
</compile_context>

<pallas_src>
import functools
import inspect

import numpy as np
import jax
import jax.numpy as jnp
from jax.experimental import pallas as pl
from jax.experimental.pallas import tpu as pltpu

NUM_CLASSES = 16
BACKBONE_LAYERS = (1, 1, 1, 1)
BN_EPS = 1e-5
ASPP_DILATIONS = (6, 12, 18, 24)
BF16 = jnp.bfloat16

VMEM_LIMIT_BYTES = 32 * 1024 * 1024     # explicit scoped-VMEM budget (safe v5e/v6e/v7x)
_VMEM_TILE_BUDGET = 20 * 1024 * 1024    # per-kernel tile budget used by tile pickers


def _round_up(x, m):
    return (x + m - 1) // m * m


def _vmem_capacity_bytes():
    try:
        return int(pltpu.get_tpu_info().vmem_capacity_bytes)
    except Exception:
        return 64 * 1024 * 1024         # conservative (v7x-sized) fallback


_VMEM_CAP = _vmem_capacity_bytes()


def _mosaic_params():
    return pltpu.CompilerParams(
        dimension_semantics=("parallel", "parallel", "arbitrary"),
        vmem_limit_bytes=VMEM_LIMIT_BYTES)


def _maybe_buffered_spec(block_shape, index_map, n_steps):
    """BlockSpec; 3-deep pipelining on long reduction streams when supported."""
    if n_steps >= 4 and hasattr(pl, "Buffered"):
        try:
            if "pipeline_mode" in inspect.signature(pl.BlockSpec).parameters:
                return pl.BlockSpec(block_shape, index_map,
                                    pipeline_mode=pl.Buffered(3))
        except (TypeError, ValueError):
            pass
    return pl.BlockSpec(block_shape, index_map)


# ----------------------------------------------------------------------------
# Pallas kernel 1: tiled matmul + bias, optional fused ReLU / elementwise
# epilogue.  Used by every 1x1 conv and the strided stem conv.
# ----------------------------------------------------------------------------
def _matmul_kernel(*refs, relu, epilogue):
    if epilogue is None:
        x_ref, w_ref, b_ref, o_ref, acc_ref = refs
        e_ref = None
    else:
        x_ref, w_ref, b_ref, e_ref, o_ref, acc_ref = refs

    k = pl.program_id(2)

    @pl.when(k == 0)
    def _init():
        acc_ref[...] = jnp.zeros_like(acc_ref)

    # bf16 x bf16 -> fp32 accumulation on the MXU.
    acc_ref[...] += jnp.dot(x_ref[...], w_ref[...],
                            preferred_element_type=jnp.float32)

    @pl.when(k == pl.num_programs(2) - 1)
    def _finalize():
        out = acc_ref[...] + b_ref[...]
        if epilogue == "mul":            # DADA fusion: (conv + b) * feat
            out = out * e_ref[...].astype(jnp.float32)
        elif epilogue == "add_relu":     # residual: relu(conv + b + identity)
            out = jnp.maximum(out + e_ref[...].astype(jnp.float32), 0.0)
        elif relu:
            out = jnp.maximum(out, 0.0)
        o_ref[...] = out.astype(o_ref.dtype)


def _pad2(x, rows, cols):
    r, c = x.shape
    if r == rows and c == cols:
        return x
    return jnp.pad(x, ((0, rows - r), (0, cols - c)))


def _pick_tk(kp, cap=2048):
    """Largest multiple of 128 that divides kp and is <= cap (kp is a 128-multiple)."""
    best = 128
    t = 256
    while t <= cap:
        if kp % t == 0:
            best = t
        t += 128
    return min(best, kp)


def matmul_bias(lhs, rhs, bias, *, relu=False, extra=None, epilogue=None,
                out_dtype=jnp.float32):
    """(M,K) @ (K,N) + bias[N] with optional fused ReLU / elementwise epilogue.

    Operands (incl. the fused 'extra' stream) are bf16; accumulation and the
    epilogue math are fp32; output dtype is configurable (bf16 intermediates).
    """
    M, K = lhs.shape
    K2, N = rhs.shape
    assert K == K2
    assert (extra is None) == (epilogue is None)

    # --- tile selection ---------------------------------------------------
    Mp = _round_up(M, 16)
    if Mp <= 512:
        # Keep >=2 blocks on the 'i' parallel axis so both v7x TensorCores get
        # work on skinny matmuls (harmless on 1-TC v5e/v6e).
        tm = Mp // 2 if Mp >= 32 else Mp
    else:
        # Larger tm on 128-MiB-VMEM chips (v5e/v6e); conservative on v7x.
        tm = 1024 if (_VMEM_CAP >= 96 * 2**20 and M >= 1024) else 512
        Mp = _round_up(M, tm)
    Np = _round_up(N, 128)
    if Np % 512 == 0:
        tn = 512
    elif Np % 256 == 0:
        tn = 256
    else:
        tn = 128
    Kp = _round_up(K, 128)
    tk = _pick_tk(Kp, cap=2048)
    n_k = Kp // tk

    lhs_p = _pad2(lhs.astype(BF16), Mp, Kp)
    rhs_p = _pad2(rhs.astype(BF16), Kp, Np)
    b_p = _pad2(bias.astype(jnp.float32).reshape(1, N), 1, Np)

    inputs = [lhs_p, rhs_p, b_p]
    in_specs = [
        _maybe_buffered_spec((tm, tk), lambda i, j, k: (i, k), n_k),
        pl.BlockSpec((tk, tn), lambda i, j, k: (k, j)),
        pl.BlockSpec((1, tn), lambda i, j, k: (0, j)),
    ]
    if extra is not None:
        inputs.append(_pad2(extra.astype(BF16), Mp, Np))
        in_specs.append(pl.BlockSpec((tm, tn), lambda i, j, k: (i, j)))

    grid = (Mp // tm, Np // tn, n_k)
    out = pl.pallas_call(
        functools.partial(_matmul_kernel, relu=relu, epilogue=epilogue),
        out_shape=jax.ShapeDtypeStruct((Mp, Np), out_dtype),
        grid_spec=pltpu.PrefetchScalarGridSpec(
            num_scalar_prefetch=0,
            grid=grid,
            in_specs=in_specs,
            out_specs=pl.BlockSpec((tm, tn), lambda i, j, k: (i, j)),
            scratch_shapes=[pltpu.VMEM((tm, tn), jnp.float32)],
        ),
        compiler_params=_mosaic_params(),
    )(*inputs)
    if (Mp, Np) != (M, N):
        out = out[:M, :N]
    return out


# ----------------------------------------------------------------------------
# Pallas kernel 2: im2col-free 3x3 stride-1 "same" (multi-dilation) convolution.
# The padded NHWC feature map is streamed once per Cin chunk; taps are static
# VMEM slices.  Used for backbone conv2 layers and the fused ASPP heads.
# ----------------------------------------------------------------------------
def _dconv_kernel(x_ref, w_ref, b_ref, o_ref, acc_ref, *, taps, relu):
    # x_ref : (1, Hp, Wp, tc)  zero-padded input, one Cin chunk   (bf16)
    # w_ref : (ntaps*tc, tn)   per-tap weights for this Cin chunk (bf16)
    # b_ref : (1, tn)          fp32 bias
    # o_ref : (1, Ho, Wo, tn)
    # acc_ref: (Ho*Wo, tn) fp32 scratch
    k = pl.program_id(2)
    tc = x_ref.shape[3]
    ho, wo = o_ref.shape[1], o_ref.shape[2]

    @pl.when(k == 0)
    def _init():
        acc_ref[...] = jnp.zeros_like(acc_ref)

    acc = acc_ref[...]
    for t, (h0, w0) in enumerate(taps):
        xt = x_ref[:, h0:h0 + ho, w0:w0 + wo, :].reshape(ho * wo, tc)
        acc = acc + jnp.dot(xt, w_ref[t * tc:(t + 1) * tc, :],
                            preferred_element_type=jnp.float32)
    acc_ref[...] = acc

    @pl.when(k == pl.num_programs(2) - 1)
    def _finalize():
        out = acc_ref[...] + b_ref[...]
        if relu:
            out = jnp.maximum(out, 0.0)
        o_ref[...] = out.reshape(o_ref.shape).astype(o_ref.dtype)


def _pick_tc(cin, hp, wp, ntaps, tn, m_rows):
    """Largest Cin chunk (multiple of 128) whose VMEM footprint fits the budget."""
    if cin % 128 != 0:
        return cin
    for c in (2048, 1024, 512, 256, 128):
        if c > cin or cin % c != 0:
            continue
        vmem = (3 * hp * wp * c * 2          # input block (up to 3 buffers, bf16)
                + 2 * ntaps * c * tn * 2     # weight block (double buffered, bf16)
                + 3 * m_rows * tn * 4)       # accumulator + output buffers
        if vmem <= _VMEM_TILE_BUDGET:
            return c
    return 128


def conv2d_direct(x, branch_ws, bias, dilations, *, relu=False,
                  out_dtype=jnp.float32):
    """Sum over `dilations` of 3x3 stride-1 'same' dilated convs, WITHOUT an
    im2col slab.  `branch_ws` is a list (one entry per dilation) of HWIO
    weights (3, 3, Cin, Cout); branch biases must already be summed into `bias`.
    """
    B, H, W, Cin = x.shape
    cout = branch_ws[0].shape[-1]
    ndil = len(dilations)
    assert len(branch_ws) == ndil
    ntaps = 9 * ndil
    pmax = max(dilations)
    Hp, Wp = H + 2 * pmax, W + 2 * pmax
    Np = _round_up(cout, 128)
    tn = 256 if Np % 256 == 0 else 128
    tc = _pick_tc(Cin, Hp, Wp, ntaps, tn, H * W)
    nck = Cin // tc

    # Tap offsets into the pmax-padded map, ordered (dilation, kh, kw).
    taps = tuple((pmax + (kh - 1) * d, pmax + (kw - 1) * d)
                 for d in dilations for kh in range(3) for kw in range(3))

    # Stack per-tap (Cin, Cout) weights in tap order, then regroup rows as
    # [cin_chunk][tap][tc] so reduction step k streams exactly the rows it needs.
    wt = jnp.concatenate([w.reshape(9, Cin, cout) for w in branch_ws], axis=0)
    wt = wt.reshape(ntaps, nck, tc, cout).transpose(1, 0, 2, 3)
    wt = wt.reshape(nck * ntaps * tc, cout)
    wt = _pad2(wt.astype(BF16), nck * ntaps * tc, Np)
    b_p = _pad2(bias.astype(jnp.float32).reshape(1, cout), 1, Np)
    xp = jnp.pad(x.astype(BF16),
                 ((0, 0), (pmax, pmax), (pmax, pmax), (0, 0)))

    out = pl.pallas_call(
        functools.partial(_dconv_kernel, taps=taps, relu=relu),
        out_shape=jax.ShapeDtypeStruct((B, H, W, Np), out_dtype),
        grid_spec=pltpu.PrefetchScalarGridSpec(
            num_scalar_prefetch=0,
            grid=(B, Np // tn, nck),
            in_specs=[
                _maybe_buffered_spec((1, Hp, Wp, tc),
                                     lambda b, j, k: (b, 0, 0, k), nck),
                pl.BlockSpec((ntaps * tc, tn), lambda b, j, k: (k, j)),
                pl.BlockSpec((1, tn), lambda b, j, k: (0, j)),
            ],
            out_specs=pl.BlockSpec((1, H, W, tn), lambda b, j, k: (b, 0, 0, j)),
            scratch_shapes=[pltpu.VMEM((H * W, tn), jnp.float32)],
        ),
        compiler_params=_mosaic_params(),
    )(xp, wt, b_p)
    if Np != cout:
        out = out[..., :cout]
    return out


# ----------------------------------------------------------------------------
# Convolution dispatcher.  Weights are HWIO: (KH, KW, Cin, Cout).
# ----------------------------------------------------------------------------
def conv2d(x, w, b, *, stride=1, padding=0, dilation=1, relu=False,
           extra=None, epilogue=None, out_dtype=jnp.float32):
    B, H, W, Cin = x.shape
    KH, KW, _, Cout = w.shape
    # 3x3 stride-1 "same" convs take the im2col-free direct path.
    if (KH == 3 and KW == 3 and stride == 1 and padding == dilation
            and extra is None):
        return conv2d_direct(x, [w], b, (dilation,), relu=relu,
                             out_dtype=out_dtype)

    Ho = (H + 2 * padding - dilation * (KH - 1) - 1) // stride + 1
    Wo = (W + 2 * padding - dilation * (KW - 1) - 1) // stride + 1
    xb = x.astype(BF16)
    if KH == 1 and KW == 1 and padding == 0:
        pat = xb[:, ::stride, ::stride, :] if stride > 1 else xb
    else:
        xp = jnp.pad(xb, ((0, 0), (padding, padding), (padding, padding), (0, 0)))
        slices = []
        for kh in range(KH):
            for kw in range(KW):
                h0 = kh * dilation
                w0 = kw * dilation
                slices.append(xp[:, h0:h0 + (Ho - 1) * stride + 1:stride,
                                 w0:w0 + (Wo - 1) * stride + 1:stride, :])
        pat = jnp.concatenate(slices, axis=-1)       # (B,Ho,Wo,KH*KW*Cin) bf16
    M = B * Ho * Wo
    K = KH * KW * Cin
    ex = extra.reshape(M, Cout) if extra is not None else None
    out = matmul_bias(pat.reshape(M, K), w.reshape(K, Cout), b,
                      relu=relu, extra=ex, epilogue=epilogue,
                      out_dtype=out_dtype)
    return out.reshape(B, Ho, Wo, Cout)


def maxpool_3x3_s2_p1(x):
    """nn.MaxPool2d(3, stride=2, padding=1) in NHWC (plain-JAX glue).
    TODO(synk): could be folded into the stem conv's Pallas epilogue."""
    B, H, W, C = x.shape
    Ho = (H + 2 - 3) // 2 + 1
    Wo = (W + 2 - 3) // 2 + 1
    xp = jnp.pad(x, ((0, 0), (1, 1), (1, 1), (0, 0)),
                 constant_values=float("-inf"))
    out = None
    for kh in range(3):
        for kw in range(3):
            sl = xp[:, kh:kh + (Ho - 1) * 2 + 1:2, kw:kw + (Wo - 1) * 2 + 1:2, :]
            out = sl if out is None else jnp.maximum(out, sl)
    return out


# ----------------------------------------------------------------------------
# Deterministic parameter construction.
# ----------------------------------------------------------------------------
class KeyGen:
    def __init__(self, seed):
        self._key = jax.random.PRNGKey(seed)

    def __call__(self):
        self._key, k = jax.random.split(self._key)
        return k


def make_conv(kg, kh, kw, cin, cout, std, fold_bn=False):
    w = jax.random.normal(kg(), (kh, kw, cin, cout), dtype=jnp.float32) * std
    b = jnp.zeros((cout,), jnp.float32)
    if fold_bn:
        # BatchNorm2d at default init (gamma=1, beta=0, running mean/var 0/1),
        # eval mode, folded into the conv as a per-output-channel scale.
        w = w * (1.0 / np.sqrt(1.0 + BN_EPS))
    return {"w": w, "b": b}


def make_aspp(kg, cin, cout, std=0.001):
    # DeepLab-v2 Classifier_Module: 4 dilated 3x3 convs (6/12/18/24), summed.
    return [make_conv(kg, 3, 3, cin, cout, std) for _ in ASPP_DILATIONS]


def _backbone_arch():
    layer_cfg = [
        # (planes, blocks, stride, dilation)
        (64,  BACKBONE_LAYERS[0], 1, 1),
        (128, BACKBONE_LAYERS[1], 2, 1),
        (256, BACKBONE_LAYERS[2], 1, 2),
        (512, BACKBONE_LAYERS[3], 1, 4),
    ]
    arch, inplanes = [], 64
    for planes, blocks, stride, dilation in layer_cfg:
        layer = []
        for bi in range(blocks):
            s = stride if bi == 0 else 1
            has_down = (bi == 0) and (s != 1 or inplanes != planes * 4)
            layer.append(dict(inplanes=inplanes, planes=planes, stride=s,
                              dilation=dilation, has_down=has_down))
            inplanes = planes * 4
        arch.append(layer)
    return arch


BACKBONE_ARCH = _backbone_arch()     # static (non-traced) architecture metadata


def make_backbone(kg, std=0.01):
    p = {"stem": make_conv(kg, 7, 7, 3, 64, std, fold_bn=True), "layers": []}
    for layer in BACKBONE_ARCH:
        lp = []
        for blk in layer:
            cin, planes = blk["inplanes"], blk["planes"]
            bp = {
                "conv1": make_conv(kg, 1, 1, cin, planes, std, True),
                "conv2": make_conv(kg, 3, 3, planes, planes, std, True),
                "conv3": make_conv(kg, 1, 1, planes, planes * 4, std, True),
            }
            if blk["has_down"]:
                bp["down"] = make_conv(kg, 1, 1, cin, planes * 4, std, True)
            lp.append(bp)
        p["layers"].append(lp)
    return p


def make_dada_params(seed=42):
    kg = KeyGen(seed)
    params = {}
    params["backbone"] = make_backbone(kg)
    # _init_params std=0.001 for the new modules (biases zero).
    params["aux_enc_depth"] = make_aspp(kg, 2048, 128)            # AuxEncoder
    params["aux_enc_inst"] = make_aspp(kg, 2048, 128)             # DecFinalClassifier(128, 2048)
    params["dec_sing_conv"] = make_conv(kg, 1, 1, 128, 2048, 0.001)  # DecSingleConv
    params["semantic_head"] = make_aspp(kg, 2048, NUM_CLASSES)    # DecFinalClassifier(NUM_CLASSES, 2048)
    params["offset_head"] = make_conv(kg, 1, 1, 128, 2, 0.001)    # OffsetHead
    return params


# ----------------------------------------------------------------------------
# Forward-pass pieces.
# ----------------------------------------------------------------------------
def bottleneck_fwd(arch, prm, x):
    s, d = arch["stride"], arch["dilation"]
    out = conv2d(x, prm["conv1"]["w"], prm["conv1"]["b"], stride=s, relu=True,
                 out_dtype=BF16)
    out = conv2d(out, prm["conv2"]["w"], prm["conv2"]["b"],
                 padding=d, dilation=d, relu=True, out_dtype=BF16)
    if arch["has_down"]:
        identity = conv2d(x, prm["down"]["w"], prm["down"]["b"], stride=s,
                          out_dtype=BF16)
    else:
        identity = x
    # conv3 with the residual add + ReLU fused into the matmul epilogue.
    return conv2d(out, prm["conv3"]["w"], prm["conv3"]["b"],
                  extra=identity, epilogue="add_relu", out_dtype=BF16)


def backbone_fwd(prm, x):
    x = conv2d(x, prm["stem"]["w"], prm["stem"]["b"], stride=2, padding=3,
               relu=True, out_dtype=BF16)
    x = maxpool_3x3_s2_p1(x)
    for arch_layer, prm_layer in zip(BACKBONE_ARCH, prm["layers"]):
        for arch_blk, prm_blk in zip(arch_layer, prm_layer):
            x = bottleneck_fwd(arch_blk, prm_blk, x)
    return x  # (B, H/8, W/8, 2048) bf16


def depth_branch(params, feat):
    """aux_enc_depth ASPP (128 ch) + DADA depth head (channel mean) fused as one
    extra output channel of a single im2col-free direct conv."""
    branches = params["aux_enc_depth"]
    ws, b_enc = [], None
    for br in branches:
        w = br["w"]                                               # (3,3,2048,128)
        ws.append(jnp.concatenate([w, jnp.mean(w, axis=-1, keepdims=True)],
                                  axis=-1))                       # (3,3,2048,129)
        b_enc = br["b"] if b_enc is None else b_enc + br["b"]
    b_cat = jnp.concatenate([b_enc, jnp.mean(b_enc).reshape(1)])
    out = conv2d_direct(feat, ws, b_cat, ASPP_DILATIONS, out_dtype=BF16)
    enc = out[..., :128]                                          # bf16, feeds decoder
    depth = out[..., 128:129].astype(jnp.float32)                 # final head
    return enc, depth


def inst_sem_heads(params, dec_out):
    """Semantic (16) + center (1) + offset (2) heads folded into ONE direct conv.

    center = channel-mean of the instance-encoder ASPP output (DADA style),
    offset = 1x1 conv of it; both are linear in dec_out, so they are folded as
    composed weight columns (column-mean, W_inst @ W_offset)."""
    sem_br = params["semantic_head"]
    inst_br = params["aux_enc_inst"]
    w_off = params["offset_head"]["w"].reshape(128, 2)
    b_off_head = params["offset_head"]["b"]
    ws, b_sem, b_inst = [], None, None
    for sb, ib in zip(sem_br, inst_br):
        w_s, w_i = sb["w"], ib["w"]
        w_c = jnp.mean(w_i, axis=-1, keepdims=True)               # center column
        w_o = jnp.einsum("hwkc,cn->hwkn", w_i, w_off)             # offset columns
        ws.append(jnp.concatenate([w_s, w_c, w_o], axis=-1))      # (3,3,2048,19)
        b_sem = sb["b"] if b_sem is None else b_sem + sb["b"]
        b_inst = ib["b"] if b_inst is None else b_inst + ib["b"]
    b_cent = jnp.mean(b_inst).reshape(1)
    b_offk = b_inst @ w_off + b_off_head
    b_cat = jnp.concatenate([b_sem, b_cent, b_offk])
    out = conv2d_direct(dec_out, ws, b_cat, ASPP_DILATIONS, out_dtype=jnp.float32)
    sem = out[..., :NUM_CLASSES]
    center = out[..., NUM_CLASSES:NUM_CLASSES + 1]
    offset = out[..., NUM_CLASSES + 1:NUM_CLASSES + 3]
    return sem, center, offset


def _nhwc_to_nchw(x):
    return jnp.transpose(x, (0, 3, 1, 2))


def _dada_forward(params, x_nchw):
    """Replicates DADAModel.forward with TRAIN_DEPTH_BRANCH=True,
    TRAIN_INSTANCE_BRANCH=True, TRAIN_OFFSET_HEAD=True, CENTER_HEAD_DADA_STYLE=True."""
    x = jnp.transpose(x_nchw.astype(jnp.float32), (0, 2, 3, 1))   # NCHW -> NHWC
    pred = {}

    feat = backbone_fwd(params["backbone"], x)                    # (B, h, w, 2048) bf16

    # depth branch (ASPP + fused channel-mean depth head)
    depth_enc_out, pred_depth = depth_branch(params, feat)
    pred["depth"] = _nhwc_to_nchw(pred_depth)

    # decoder 1x1 conv 128 -> 2048 with the DADA fusion multiply (x * dec_out)
    # fused into the matmul epilogue.
    dsc = params["dec_sing_conv"]
    dec_out = conv2d(depth_enc_out, dsc["w"], dsc["b"], extra=feat,
                     epilogue="mul", out_dtype=BF16)

    # semantic head + instance branch (center / offset) in a single fused conv.
    sem, center, offset = inst_sem_heads(params, dec_out)
    pred["semantic"] = _nhwc_to_nchw(sem)
    pred["center"] = _nhwc_to_nchw(center)
    pred["offset"] = _nhwc_to_nchw(offset)
    return pred


dada_forward = jax.jit(_dada_forward)


# ----------------------------------------------------------------------------
if __name__ == "__main__":
    key = jax.random.PRNGKey(0)
    B, C_in, H, W = 2, 3, 16, 16
    x = jax.random.normal(key, (B, C_in, H, W), dtype=jnp.float32)  # NCHW, like PyTorch

    params = make_dada_params(seed=42)

    # Sanity check 1: fused Pallas matmul vs jnp reference
    # (bf16 operands / fp32 accumulation -> loose tolerance).
    ka, kb = jax.random.split(jax.random.PRNGKey(1))
    A = jax.random.normal(ka, (64, 256), dtype=jnp.float32)
    Bm = jax.random.normal(kb, (256, 192), dtype=jnp.float32)
    bias = jnp.arange(192, dtype=jnp.float32) * 0.01
    got = matmul_bias(A, Bm, bias, relu=True)
    ref = jnp.maximum(A @ Bm + bias, 0.0)
    assert float(jnp.max(jnp.abs(got - ref))) < 1.0, "matmul kernel mismatch"

    # Sanity check 2: im2col-free direct conv vs lax.conv_general_dilated.
    kc, kw = jax.random.split(jax.random.PRNGKey(2))
    xc = jax.random.normal(kc, (2, 8, 8, 128), dtype=jnp.float32)
    wc = jax.random.normal(kw, (3, 3, 128, 32), dtype=jnp.float32) * 0.05
    bc = jnp.arange(32, dtype=jnp.float32) * 0.01
    got_c = conv2d_direct(xc, [wc], bc, (1,))
    ref_c = jax.lax.conv_general_dilated(
        xc, wc, window_strides=(1, 1), padding=((1, 1), (1, 1)),
        dimension_numbers=("NHWC", "HWIO", "NHWC")) + bc
    assert float(jnp.max(jnp.abs(got_c - ref_c))) < 1.0, "direct conv mismatch"

    pred = dada_forward(params, x)
    pred = jax.block_until_ready(pred)

    h_out, w_out = H // 8, W // 8
    assert pred["depth"].shape == (B, 1, h_out, w_out)
    assert pred["semantic"].shape == (B, NUM_CLASSES, h_out, w_out)
    assert pred["center"].shape == (B, 1, h_out, w_out)
    assert pred["offset"].shape == (B, 2, h_out, w_out)
    for k, v in pred.items():
        assert bool(jnp.all(jnp.isfinite(v))), k

    print("KERNEL_OK")
</pallas_src>

<mosaic_0001>
module attributes {stable_mosaic.version = 11 : i64} {
  func.func @_matmul_kernel(%arg0: i32, %arg1: i32, %arg2: i32, %arg3: memref<32x256xbf16, #tpu.memory_space<vmem>>, %arg4: memref<256x256xbf16, #tpu.memory_space<vmem>>, %arg5: memref<1x256xf32, #tpu.memory_space<vmem>>, %arg6: memref<32x256xf32, #tpu.memory_space<vmem>>, %arg7: memref<32x256xf32, #tpu.memory_space<vmem>>) attributes {dimension_semantics = [#tpu.dimension_semantics<parallel>, #tpu.dimension_semantics<parallel>, #tpu.dimension_semantics<arbitrary>], iteration_bounds = array<i64: 2, 1, 1>, scalar_prefetch = 0 : i64, scratch_operands = 1 : i64, tpu.core_type = #tpu.core_type<tc>, window_params = [{transform_indices = @transform_0, window_bounds = array<i64: 32, 256>}, {transform_indices = @transform_1, window_bounds = array<i64: 256, 256>}, {transform_indices = @transform_2, window_bounds = array<i64: 1, 256>}, {transform_indices = @transform_3, window_bounds = array<i64: 32, 256>}]} {
    %c0_i32 = arith.constant 0 : i32
    %0 = arith.cmpi eq, %arg2, %c0_i32 : i32
    %1 = arith.extui %0 : i1 to i32
    %c0_i32_0 = arith.constant 0 : i32
    %2 = arith.cmpi ne, %1, %c0_i32_0 : i32
    scf.if %2 {
      %cst_10 = arith.constant 0.000000e+00 : f32
      %12 = vector.broadcast %cst_10 : f32 to vector<32x256xf32>
      %c0_11 = arith.constant 0 : index
      %c0_12 = arith.constant 0 : index
      %13 = vector.load %arg7[%c0_11, %c0_12] : memref<32x256xf32, #tpu.memory_space<vmem>>, vector<32x256xf32>
      tpu.vector_store %arg7[%c0_11, %c0_12], %12 {strides = array<i32>} : memref<32x256xf32, #tpu.memory_space<vmem>>, vector<32x256xf32>,
    } else {
    }
    %c0 = arith.constant 0 : index
    %c0_1 = arith.constant 0 : index
    %3 = vector.load %arg7[%c0, %c0_1] : memref<32x256xf32, #tpu.memory_space<vmem>>, vector<32x256xf32>
    %c0_2 = arith.constant 0 : index
    %c0_3 = arith.constant 0 : index
    %4 = vector.load %arg3[%c0_2, %c0_3] : memref<32x256xbf16, #tpu.memory_space<vmem>>, vector<32x256xbf16>
    %c0_4 = arith.constant 0 : index
    %c0_5 = arith.constant 0 : index
    %5 = vector.load %arg4[%c0_4, %c0_5] : memref<256x256xbf16, #tpu.memory_space<vmem>>, vector<256x256xbf16>
    %cst = arith.constant dense<0.000000e+00> : vector<32x256xf32>
    %6 = tpu.matmul %4, %5, %cst {dimension_numbers = #tpu.dot_dimension_numbers<[1], [0], [0], [1], [0, 0, 1, 1], [], []>} : vector<32x256xbf16>, vector<256x256xbf16>, vector<32x256xf32> -> vector<32x256xf32>
    %7 = arith.addf %3, %6 : vector<32x256xf32>
    %c0_6 = arith.constant 0 : index
    %c0_7 = arith.constant 0 : index
    %8 = vector.load %arg7[%c0_6, %c0_7] : memref<32x256xf32, #tpu.memory_space<vmem>>, vector<32x256xf32>
    tpu.vector_store %arg7[%c0_6, %c0_7], %7 {strides = array<i32>} : memref<32x256xf32, #tpu.memory_space<vmem>>, vector<32x256xf32>,
    %c0_i32_8 = arith.constant 0 : i32
    %9 = arith.cmpi eq, %arg2, %c0_i32_8 : i32
    %10 = arith.extui %9 : i1 to i32
    %c0_i32_9 = arith.constant 0 : i32
    %11 = arith.cmpi ne, %10, %c0_i32_9 : i32
    scf.if %11 {
      %c0_10 = arith.constant 0 : index
      %c0_11 = arith.constant 0 : index
      %12 = vector.load %arg7[%c0_10, %c0_11] : memref<32x256xf32, #tpu.memory_space<vmem>>, vector<32x256xf32>
      %c0_12 = arith.constant 0 : index
      %c0_13 = arith.constant 0 : index
      %13 = vector.load %arg5[%c0_12, %c0_13] : memref<1x256xf32, #tpu.memory_space<vmem>>, vector<1x256xf32>
      %14 = vector.broadcast %13 : vector<1x256xf32> to vector<32x256xf32>
      %15 = arith.addf %12, %14 : vector<32x256xf32>
      %cst_14 = arith.constant 0.000000e+00 : f32
      %16 = vector.broadcast %cst_14 : f32 to vector<32x256xf32>
      %17 = arith.maximumf %15, %16 : vector<32x256xf32>
      %c0_15 = arith.constant 0 : index
      %c0_16 = arith.constant 0 : index
      %18 = vector.load %arg6[%c0_15, %c0_16] : memref<32x256xf32, #tpu.memory_space<vmem>>, vector<32x256xf32>
      tpu.vector_store %arg6[%c0_15, %c0_16], %17 {strides = array<i32>} : memref<32x256xf32, #tpu.memory_space<vmem>>, vector<32x256xf32>,
    } else {
    }
    return
  }
  func.func @transform_0(%arg0: i32, %arg1: i32, %arg2: i32) -> (i32, i32) {
    %c0_i32 = arith.constant 0 : i32
    return %arg0, %arg2 : i32, i32
  }
  func.func @transform_1(%arg0: i32, %arg1: i32, %arg2: i32) -> (i32, i32) {
    %c0_i32 = arith.constant 0 : i32
    return %arg2, %arg1 : i32, i32
  }
  func.func @transform_2(%arg0: i32, %arg1: i32, %arg2: i32) -> (i32, i32) {
    %c0_i32 = arith.constant 0 : i32
    %c0_i32_0 = arith.constant 0 : i32
    return %c0_i32, %arg1 : i32, i32
  }
  func.func @transform_3(%arg0: i32, %arg1: i32, %arg2: i32) -> (i32, i32) {
    %c0_i32 = arith.constant 0 : i32
    return %arg0, %arg1 : i32, i32
  }
}

</mosaic_0001>

<llo_original>
// kernel: tpu_custom_call.1
$region0: #{tpu_custom_call.1}
  #allocation0 [shape = 'u32[]', space=smem, size = 0x4, offset = 0x4, fixed_abs, tag = 'smem constant byte address 0x4 - core index']
  #allocation1 [shape = 'u32[144,128]{1,0:T(1,128)}', space=vmem, size = 0x12000, scoped, tag = 'internal scratch']
  #allocation2 [shape = 'f32[32,256]{1,0:T(8,128)}', space=vmem, size = 0x8000, scoped, tag = 'scratch operand']
  %s0 = inlined_call_operand.hbm [shape: bf16[64,256], index: 0, kind: input, shape index: {}]
  %s1 = inlined_call_operand.hbm [shape: bf16[256,256], index: 1, kind: input, shape index: {}]
  %s2 = inlined_call_operand.vmem [shape: f32[1,256], index: 2, kind: input, shape index: {}]
  %s3 = inlined_call_operand.hbm [shape: f32[64,256], index: 3, kind: output, shape index: {}]
  %s4 = sld [smem:[#allocation0]]
  $region61: #{tpu_custom_call.1} parent=0
    _
  %s6 = ssub.s32 1, %s4
  %s7 = scalar_select 0, %s6, %s4
  $region1: #{tpu_custom_call.1} parent=0
    #allocation3 [shape = 'u8[32768]{0}', space=vmem, size = 0x8000, scoped, tag = 'input window, operand 0']
    #allocation4 [shape = 's32[2]{0}', space=sflag, size = 0x8, scoped, tag = 'scoped memory for tpu_custom_call.1']
    #allocation5 [shape = 's32[2]{0}', space=sflag, size = 0x8, scoped, tag = 'scoped memory for tpu_custom_call.1']
    #allocation6 [shape = 'u8[131072]{0}', space=vmem, size = 0x20000, scoped, tag = 'input window, operand 1, single buffered']
    #allocation7 [shape = 's32[1]{0}', space=sflag, size = 0x4, scoped, tag = 'scoped memory for tpu_custom_call.1']
    #allocation8 [shape = 'u8[65536]{0}', space=vmem, size = 0x10000, scoped, tag = 'output window, operand 0']
    %8 = vsyncpa [#allocation4], 0
    %s9 = scalar_lea.sflag [#allocation4], 1
    %10 = vsyncpa %s9, 0
    %11 = vsyncpa [#allocation7], 0
    %12 = vsyncpa [#allocation5], 0
    %s13 = scalar_lea.sflag [#allocation5], 1
    %14 = vsyncpa %s13, 0
    loop: start=0, step=1, limit=4
    $region2: #{tpu_custom_call.1} parent=1 // loop_pre_header
      _
    $region3: #{tpu_custom_call.1} parent=1 // loop_header
      %s16 = sphi 0, %s20
      %p17 = scmp.ge.s32.totalorder %s16, 4
      %s23 = sphi 0, %s42
      %s24 = sphi 0, %s38
      %s25 = sphi 0, %s34
      %s26 = sphi 0, %s23
      %s27 = sphi 0, %s24
      %s28 = sphi 0, %s25
      %s29 = sphi 0, %s26
      %s30 = sphi 0, %s27
      %s31 = sphi 0, %s28
      %s47 = sphi 0, %s49
      %s50 = sphi 0, %s47
      %s51 = sphi 0, %s50
      %s67 = sphi 0, %s51
      %s75 = sphi 0, %s77
      %s78 = sphi 0, %s75
      %s79 = sphi 0, %s78
      %s95 = sphi 0, %s79
      %s101 = sphi 0, %s103
      %s104 = sphi 0, %s101
      %s105 = sphi 0, %s104
      %s121 = sphi 0, %s105
      %s129 = sphi 0, %s131
      %s132 = sphi 0, %s129
      %s133 = sphi 0, %s132
      %s149 = sphi 0, %s133
    $region4: #{tpu_custom_call.1} parent=1 // loop_header_branch
      %19 = sbr.rel (%p17) target = $region8
    $region5: #{tpu_custom_call.1} parent=1 // loop_body
      %s21 = ssub.s32 %s16, 1
      %s22 = ssub.s32 %s16, 2
      %s32 = sadd.s32 1, %s25
      %p33 = scmp.ge.s32.totalorder %s32, 1
      %s34 = scalar_select %p33, 0, %s32
      %s35 = sadd.s32 1, %s24
      %s36 = scalar_select %p33, %s35, %s24
      %p37 = scmp.ge.s32.totalorder %s36, 1
      %s38 = scalar_select %p37, 0, %s36
      %s39 = sadd.s32 1, %s23
      %s40 = scalar_select %p37, %s39, %s23
      %p41 = scmp.ge.s32.totalorder %s40, 2
      %s42 = scalar_select %p41, 0, %s40
      %s43 = ssub.s32 %s23, %s42
      %s44 = ssub.s32 %s25, %s34
      %s45 = sor.u32 %s43, %s44
      %p46 = scmp.eq.s32.totalorder %s45, 0
      %s48 = sadd.s32 %s47, 1
      %s49 = scalar_select %p46, %s47, %s48
      %p52 = pneg %p46
      %p53 = scmp.eq.s32.totalorder %s16, 1
      %p54 = por %p52, %p53
      %p55 = scmp.ne.s32.totalorder %s47, %s50
      %p56 = scmp.eq.s32.totalorder %s16, 0
      %p57 = por %p55, %p56
      %p58 = scmp.ne.s32.totalorder %s47, %s50
      %p59 = scmp.eq.s32.totalorder %s21, 1
      %p60 = por %p58, %p59
      %p61 = scmp.ne.s32.totalorder %s50, %s51
      %p62 = scmp.eq.s32.totalorder %s21, 0
      %p63 = por %p61, %p62
      %p64 = scmp.ne.s32.totalorder %s50, %s51
      %p65 = scmp.eq.s32.totalorder %s22, 1
      %p66 = por %p64, %p65
      %p68 = scmp.ne.s32.totalorder %s51, %s67
      %p69 = scmp.eq.s32.totalorder %s22, 0
      %p70 = por %p68, %p69
      %s71 = ssub.s32 %s25, %s34
      %s72 = ssub.s32 %s24, %s38
      %s73 = sor.u32 %s71, %s72
      %p74 = scmp.eq.s32.totalorder %s73, 0
      %s76 = sadd.s32 %s75, 1
      %s77 = scalar_select %p74, %s75, %s76
      %p80 = pneg %p74
      %p81 = scmp.eq.s32.totalorder %s16, 1
      %p82 = por %p80, %p81
      %p83 = scmp.ne.s32.totalorder %s75, %s78
      %p84 = scmp.eq.s32.totalorder %s16, 0
      %p85 = por %p83, %p84
      %p86 = scmp.ne.s32.totalorder %s75, %s78
      %p87 = scmp.eq.s32.totalorder %s21, 1
      %p88 = por %p86, %p87
      %p89 = scmp.ne.s32.totalorder %s78, %s79
      %p90 = scmp.eq.s32.totalorder %s21, 0
      %p91 = por %p89, %p90
      %p92 = scmp.ne.s32.totalorder %s78, %s79
      %p93 = scmp.eq.s32.totalorder %s22, 1
      %p94 = por %p92, %p93
      %p96 = scmp.ne.s32.totalorder %s79, %s95
      %p97 = scmp.eq.s32.totalorder %s22, 0
      %p98 = por %p96, %p97
      %s99 = ssub.s32 %s24, %s38
      %p100 = scmp.eq.s32.totalorder %s99, 0
      %s102 = sadd.s32 %s101, 1
      %s103 = scalar_select %p100, %s101, %s102
      %p106 = pneg %p100
      %p107 = scmp.eq.s32.totalorder %s16, 1
      %p108 = por %p106, %p107
      %p109 = scmp.ne.s32.totalorder %s101, %s104
      %p110 = scmp.eq.s32.totalorder %s16, 0
      %p111 = por %p109, %p110
      %p112 = scmp.ne.s32.totalorder %s101, %s104
      %p113 = scmp.eq.s32.totalorder %s21, 1
      %p114 = por %p112, %p113
      %p115 = scmp.ne.s32.totalorder %s104, %s105
      %p116 = scmp.eq.s32.totalorder %s21, 0
      %p117 = por %p115, %p116
      %p118 = scmp.ne.s32.totalorder %s104, %s105
      %p119 = scmp.eq.s32.totalorder %s22, 1
      %p120 = por %p118, %p119
      %p122 = scmp.ne.s32.totalorder %s105, %s121
      %p123 = scmp.eq.s32.totalorder %s22, 0
      %p124 = por %p122, %p123
      %s125 = ssub.s32 %s23, %s42
      %s126 = ssub.s32 %s24, %s38
      %s127 = sor.u32 %s125, %s126
      %p128 = scmp.eq.s32.totalorder %s127, 0
      %s130 = sadd.s32 %s129, 1
      %s131 = scalar_select %p128, %s129, %s130
      %p134 = pneg %p128
      %p135 = scmp.eq.s32.totalorder %s16, 1
      %p136 = por %p134, %p135
      %p137 = scmp.ne.s32.totalorder %s129, %s132
      %p138 = scmp.eq.s32.totalorder %s16, 0
      %p139 = por %p137, %p138
      %p140 = scmp.ne.s32.totalorder %s129, %s132
      %p141 = scmp.eq.s32.totalorder %s21, 1
      %p142 = por %p140, %p141
      %p143 = scmp.ne.s32.totalorder %s132, %s133
      %p144 = scmp.eq.s32.totalorder %s21, 0
      %p145 = por %p143, %p144
      %p146 = scmp.ne.s32.totalorder %s132, %s133
      %p147 = scmp.eq.s32.totalorder %s22, 1
      %p148 = por %p146, %p147
      %p150 = scmp.ne.s32.totalorder %s133, %s149
      %p151 = scmp.eq.s32.totalorder %s22, 0
      %p152 = por %p150, %p151
      %p153 = scmp.le.s32.totalorder 1, %s16
      %p154 = scmp.lt.s32.totalorder %s16, 3
      %p155 = pnand %p153, %p154
      %p156 = pneg %p155
      // Predicated region
      $region9: #{tpu_custom_call.1} parent=5 // pred_check
        _
      $region10: #{tpu_custom_call.1} parent=5 // pred_check_branch
        %158 = sbr.rel (%p155) target = $region12
      $region11: #{tpu_custom_call.1} parent=5 // pred_region
        %s159 = ssub.s32 %s16, 1
        // Predicated region
        $region13: #{tpu_custom_call.1} parent=11 // pred_check
          %p160 = pneg %p91
        $region14: #{tpu_custom_call.1} parent=11 // pred_check_branch
          %162 = sbr.rel (%p160) target = $region16
        $region15: #{tpu_custom_call.1} parent=11 // pred_region
          %s163 = smul.u32 32, %s28
          %s164 = smul.u32 2, %s27
          %s166 = ssub.s32 4096, 4096
          %167 = vsyncadd [#allocation7], %s166
          %s168 = smul.addr %s163, 2
          %s169 = sadd.s32 %s164, %s168
          %s170 = smul.addr %s169, 64
          %s171 = scalar_lea.hbm %s1, %s170
          %s172 = sshll.u32 [#allocation6], 4
          %s173 = int_to_ptr.vmem [resolvable:$true] %s172
          %178 = dma.hbm_to_vmem [thread:$0]  %s171, 4096, %s173, [#allocation7], 128, 128, 8
        $region16: #{tpu_custom_call.1} parent=11 // pred_fallthru
          _
        // Predicated region
        $region17: #{tpu_custom_call.1} parent=11 // pred_check
          %p179 = pneg %p117
        $region18: #{tpu_custom_call.1} parent=11 // pred_check_branch
          %181 = sbr.rel (%p179) target = $region20
        $region19: #{tpu_custom_call.1} parent=11 // pred_region
          %s182 = smul.u32 2, %s27
          %p183 = scmp.lt.s32.totalorder %s182, 1
          %s184 = scalar_select %p183, %s182, 1
          %s185 = scalar_lea.vmem %s2, %s184
          %s186 = smul.u32 2, %s27
        $region20: #{tpu_custom_call.1} parent=11 // pred_fallthru
          _
      $region12: #{tpu_custom_call.1} parent=5 // pred_fallthru
        _
      %p187 = scmp.lt.s32.totalorder %s16, 2
      // Predicated region
      $region21: #{tpu_custom_call.1} parent=5 // pred_check
        %p188 = pneg %p187
      $region22: #{tpu_custom_call.1} parent=5 // pred_check_branch
        %190 = sbr.rel (%p188) target = $region24
      $region23: #{tpu_custom_call.1} parent=5 // pred_region
        // Predicated region
        $region25: #{tpu_custom_call.1} parent=23 // pred_check
          %p191 = pneg %p57
        $region26: #{tpu_custom_call.1} parent=23 // pred_check_branch
          %193 = sbr.rel (%p191) target = $region28
        $region27: #{tpu_custom_call.1} parent=23 // pred_region
          %s194 = sand.u32 %s47, 1
          %s195 = scalar_lea.sflag [#allocation4], %s194
          %s196 = sand.u32 %s47, 1
          %s197 = smul.addr %s196, 32
          %s198 = scalar_lea.vmem [#allocation3], %s197
          %s199 = smul.u32 4, %s23
          %s200 = smul.u32 2, %s25
          %s202 = ssub.s32 512, 512
          %203 = vsyncadd %s195, %s202
          %s204 = smul.addr %s199, 2
          %s205 = sadd.s32 %s200, %s204
          %s206 = smul.addr %s205, 64
          %s207 = scalar_lea.hbm %s0, %s206
          %s208 = sshll.u32 %s198, 4
          %s209 = int_to_ptr.vmem [resolvable:$true] %s208
          %214 = dma.hbm_to_vmem [thread:$0]  %s207, 512, %s209, %s195, 128, 128, 8
        $region28: #{tpu_custom_call.1} parent=23 // pred_fallthru
          _
      $region24: #{tpu_custom_call.1} parent=5 // pred_fallthru
        _
      %p215 = scmp.le.s32.totalorder 1, %s16
      %p216 = scmp.lt.s32.totalorder %s16, 3
      %p217 = pnand %p215, %p216
      %p218 = pneg %p217
      // Predicated region
      $region29: #{tpu_custom_call.1} parent=5 // pred_check
        _
      $region30: #{tpu_custom_call.1} parent=5 // pred_check_branch
        %220 = sbr.rel (%p217) target = $region32
      $region31: #{tpu_custom_call.1} parent=5 // pred_region
        %s221 = ssub.s32 %s16, 1
        %s222 = sand.u32 %s50, 1
        %s223 = scalar_lea.sflag [#allocation4], %s222
        %s224 = sand.u32 %s50, 1
        %s225 = smul.addr %s224, 32
        %s226 = scalar_lea.vmem [#allocation3], %s225
        // Predicated region
        $region33: #{tpu_custom_call.1} parent=31 // pred_check
          %p227 = pneg %p63
        $region34: #{tpu_custom_call.1} parent=31 // pred_check_branch
          %229 = sbr.rel (%p227) target = $region36
        $region35: #{tpu_custom_call.1} parent=31 // pred_region
          %230 = dma.done %s223, 512
        $region36: #{tpu_custom_call.1} parent=31 // pred_fallthru
          _
        // Predicated region
        $region37: #{tpu_custom_call.1} parent=31 // pred_check
          %p231 = pneg %p91
        $region38: #{tpu_custom_call.1} parent=31 // pred_check_branch
          %233 = sbr.rel (%p231) target = $region40
        $region39: #{tpu_custom_call.1} parent=31 // pred_region
          %234 = dma.done [#allocation7], 4096
        $region40: #{tpu_custom_call.1} parent=31 // pred_fallthru
          _
        %s235 = sand.u32 %s50, 1
        %s236 = scalar_lea.sflag [#allocation4], %s235
        %s237 = sand.u32 %s50, 1
        %s238 = smul.addr %s237, 32
        %s239 = scalar_lea.vmem [#allocation3], %s238
        %p240 = pneg %p63
        %p241 = pneg %p60
        %p242 = pneg %p91
        %p243 = pneg %p88
        %s244 = smul.u32 2, %s27
        %p245 = scmp.lt.s32.totalorder %s244, 1
        %s246 = scalar_select %p245, %s244, 1
        %s247 = scalar_lea.vmem %s2, %s246
        %p248 = pneg %p117
        %p249 = pneg %p114
        %p250 = pneg %p145
        %p251 = pneg %p142
        %s252 = sand.u32 %s132, 1
        %s253 = scalar_lea.sflag [#allocation5], %s252
        %s254 = sand.u32 %s132, 1
        %s255 = smul.addr %s254, 64
        %s256 = scalar_lea.vmem [#allocation8], %s255
        %s257 = smul.u32 4, %s26
        %s258 = smul.u32 2, %s28
        %s259 = smul.u32 32, %s28
        %s260 = smul.u32 2, %s27
        %s261 = smul.u32 2, %s27
        %p262 = scmp.lt.s32.totalorder %s261, 1
        %s263 = scalar_select %p262, %s261, 1
        %s264 = scalar_lea.vmem %s2, %s263
        %s265 = smul.u32 2, %s27
        %s266 = smul.u32 4, %s26
        %s267 = smul.u32 2, %s27
        %p268 = scmp.eq.s32.totalorder %s28, 0
        // Predicated region
        $region41: #{tpu_custom_call.1} parent=31 // pred_check
          %p269 = pneg %p268
        $region42: #{tpu_custom_call.1} parent=31 // pred_check_branch
          %271 = sbr.rel (%p269) target = $region44
        $region43: #{tpu_custom_call.1} parent=31 // pred_region
          %272 = vst [vmem:[#allocation2] sm:$0xff] 0.0
          %273 = vst [vmem:[#allocation2 + $0x8] sm:$0xff] 0.0
          %274 = vst [vmem:[#allocation2 + $0x10] sm:$0xff] 0.0
          %275 = vst [vmem:[#allocation2 + $0x18] sm:$0xff] 0.0
          %276 = vst [vmem:[#allocation2 + $0x20] sm:$0xff] 0.0
          %277 = vst [vmem:[#allocation2 + $0x28] sm:$0xff] 0.0
          %278 = vst [vmem:[#allocation2 + $0x30] sm:$0xff] 0.0
          %279 = vst [vmem:[#allocation2 + $0x38] sm:$0xff] 0.0
        $region44: #{tpu_custom_call.1} parent=31 // pred_fallthru
          _
        %v280 = vld [vmem:[#allocation2] sm:$0xff]
        %v281 = vld [vmem:[#allocation2 + $0x8] sm:$0xff]
        %v282 = vld [vmem:[#allocation2 + $0x10] sm:$0xff]
        %v283 = vld [vmem:[#allocation2 + $0x18] sm:$0xff]
        %v284 = vld [vmem:[#allocation2 + $0x20] sm:$0xff]
        %v285 = vld [vmem:[#allocation2 + $0x28] sm:$0xff]
        %v286 = vld [vmem:[#allocation2 + $0x30] sm:$0xff]
        %v287 = vld [vmem:[#allocation2 + $0x38] sm:$0xff]
        %v288 = vld [vmem:[%s226] sm:$0xff]
        %v289 = vld [vmem:[%s226 + $0x8] sm:$0xff]
        %v290 = vld [vmem:[%s226 + $0x10] sm:$0xff]
        %v291 = vld [vmem:[%s226 + $0x18] sm:$0xff]
        %v292 = vld [vmem:[#allocation6] sm:$0xff]
        %v293 = vld [vmem:[#allocation6 + $0x8] sm:$0xff]
        %v294 = vld [vmem:[#allocation6 + $0x10] sm:$0xff]
        %v295 = vld [vmem:[#allocation6 + $0x18] sm:$0xff]
        %v296 = vld [vmem:[#allocation6 + $0x20] sm:$0xff]
        %v297 = vld [vmem:[#allocation6 + $0x28] sm:$0xff]
        %v298 = vld [vmem:[#allocation6 + $0x30] sm:$0xff]
        %v299 = vld [vmem:[#allocation6 + $0x38] sm:$0xff]
        %v300 = vld [vmem:[#allocation6 + $0x40] sm:$0xff]
        %v301 = vld [vmem:[#allocation6 + $0x48] sm:$0xff]
        %v302 = vld [vmem:[#allocation6 + $0x50] sm:$0xff]
        %v303 = vld [vmem:[#allocation6 + $0x58] sm:$0xff]
        %v304 = vld [vmem:[#allocation6 + $0x60] sm:$0xff]
        %v305 = vld [vmem:[#allocation6 + $0x68] sm:$0xff]
        %v306 = vld [vmem:[#allocation6 + $0x70] sm:$0xff]
        %v307 = vld [vmem:[#allocation6 + $0x78] sm:$0xff]
        %v308 = vld [vmem:[#allocation6 + $0x80] sm:$0xff]
        %v309 = vld [vmem:[#allocation6 + $0x88] sm:$0xff]
        %v310 = vld [vmem:[#allocation6 + $0x90] sm:$0xff]
        %v311 = vld [vmem:[#allocation6 + $0x98] sm:$0xff]
        %v312 = vld [vmem:[#allocation6 + $0xa0] sm:$0xff]
        %v313 = vld [vmem:[#allocation6 + $0xa8] sm:$0xff]
        %v314 = vld [vmem:[#allocation6 + $0xb0] sm:$0xff]
        %v315 = vld [vmem:[#allocation6 + $0xb8] sm:$0xff]
        %v316 = vld [vmem:[#allocation6 + $0xc0] sm:$0xff]
        %v317 = vld [vmem:[#allocation6 + $0xc8] sm:$0xff]
        %v318 = vld [vmem:[#allocation6 + $0xd0] sm:$0xff]
        %v319 = vld [vmem:[#allocation6 + $0xd8] sm:$0xff]
        %v320 = vld [vmem:[#allocation6 + $0xe0] sm:$0xff]
        %v321 = vld [vmem:[#allocation6 + $0xe8] sm:$0xff]
        %v322 = vld [vmem:[#allocation6 + $0xf0] sm:$0xff]
        %v323 = vld [vmem:[#allocation6 + $0xf8] sm:$0xff]
        %v328 = vunpack.c.l.b16 %v288
        %v329 = vunpack.c.h.b16 %v288
        %v330 = vunpack.c.l.b16 %v289
        %v331 = vunpack.c.h.b16 %v289
        %v332 = vunpack.c.l.b16 %v290
        %v333 = vunpack.c.h.b16 %v290
        %v334 = vunpack.c.l.b16 %v291
        %v335 = vunpack.c.h.b16 %v291
        %v336 = vpack.c.b16 %v330, %v328
        %v337 = vpack.c.b16 %v331, %v329
        %v338 = vpack.c.b16 %v334, %v332
        %v339 = vpack.c.b16 %v335, %v333
        %v376 = vunpack.c.l.b16 %v292
        %v377 = vunpack.c.h.b16 %v292
        %v378 = vunpack.c.l.b16 %v293
        %v379 = vunpack.c.h.b16 %v293
        %v380 = vunpack.c.l.b16 %v294
        %v381 = vunpack.c.h.b16 %v294
        %v382 = vunpack.c.l.b16 %v295
        %v383 = vunpack.c.h.b16 %v295
        %v384 = vunpack.c.l.b16 %v296
        %v385 = vunpack.c.h.b16 %v296
        %v386 = vunpack.c.l.b16 %v297
        %v387 = vunpack.c.h.b16 %v297
        %v388 = vunpack.c.l.b16 %v298
        %v389 = vunpack.c.h.b16 %v298
        %v390 = vunpack.c.l.b16 %v299
        %v391 = vunpack.c.h.b16 %v299
        %v392 = vunpack.c.l.b16 %v300
        %v393 = vunpack.c.h.b16 %v300
        %v394 = vunpack.c.l.b16 %v301
        %v395 = vunpack.c.h.b16 %v301
        %v396 = vunpack.c.l.b16 %v302
        %v397 = vunpack.c.h.b16 %v302
        %v398 = vunpack.c.l.b16 %v303
        %v399 = vunpack.c.h.b16 %v303
        %v400 = vunpack.c.l.b16 %v304
        %v401 = vunpack.c.h.b16 %v304
        %v402 = vunpack.c.l.b16 %v305
        %v403 = vunpack.c.h.b16 %v305
        %v404 = vunpack.c.l.b16 %v306
        %v405 = vunpack.c.h.b16 %v306
        %v406 = vunpack.c.l.b16 %v307
        %v407 = vunpack.c.h.b16 %v307
        %v408 = vunpack.c.l.b16 %v308
        %v409 = vunpack.c.h.b16 %v308
        %v410 = vunpack.c.l.b16 %v309
        %v411 = vunpack.c.h.b16 %v309
        %v412 = vunpack.c.l.b16 %v310
        %v413 = vunpack.c.h.b16 %v310
        %v414 = vunpack.c.l.b16 %v311
        %v415 = vunpack.c.h.b16 %v311
        %v416 = vunpack.c.l.b16 %v312
        %v417 = vunpack.c.h.b16 %v312
        %v418 = vunpack.c.l.b16 %v313
        %v419 = vunpack.c.h.b16 %v313
        %v420 = vunpack.c.l.b16 %v314
        %v421 = vunpack.c.h.b16 %v314
        %v422 = vunpack.c.l.b16 %v315
        %v423 = vunpack.c.h.b16 %v315
        %v424 = vunpack.c.l.b16 %v316
        %v425 = vunpack.c.h.b16 %v316
        %v426 = vunpack.c.l.b16 %v317
        %v427 = vunpack.c.h.b16 %v317
        %v428 = vunpack.c.l.b16 %v318
        %v429 = vunpack.c.h.b16 %v318
        %v430 = vunpack.c.l.b16 %v319
        %v431 = vunpack.c.h.b16 %v319
        %v432 = vunpack.c.l.b16 %v320
        %v433 = vunpack.c.h.b16 %v320
        %v434 = vunpack.c.l.b16 %v321
        %v435 = vunpack.c.h.b16 %v321
        %v436 = vunpack.c.l.b16 %v322
        %v437 = vunpack.c.h.b16 %v322
        %v438 = vunpack.c.l.b16 %v323
        %v439 = vunpack.c.h.b16 %v323
        %v440 = vpack.c.b16 %v378, %v376
        %v441 = vpack.c.b16 %v379, %v377
        %v442 = vpack.c.b16 %v382, %v380
        %v443 = vpack.c.b16 %v383, %v381
        %v444 = vpack.c.b16 %v386, %v384
        %v445 = vpack.c.b16 %v387, %v385
        %v446 = vpack.c.b16 %v390, %v388
        %v447 = vpack.c.b16 %v391, %v389
        %v448 = vpack.c.b16 %v394, %v392
        %v449 = vpack.c.b16 %v395, %v393
        %v450 = vpack.c.b16 %v398, %v396
        %v451 = vpack.c.b16 %v399, %v397
        %v452 = vpack.c.b16 %v402, %v400
        %v453 = vpack.c.b16 %v403, %v401
        %v454 = vpack.c.b16 %v406, %v404
        %v455 = vpack.c.b16 %v407, %v405
        %v456 = vpack.c.b16 %v410, %v408
        %v457 = vpack.c.b16 %v411, %v409
        %v458 = vpack.c.b16 %v414, %v412
        %v459 = vpack.c.b16 %v415, %v413
        %v460 = vpack.c.b16 %v418, %v416
        %v461 = vpack.c.b16 %v419, %v417
        %v462 = vpack.c.b16 %v422, %v420
        %v463 = vpack.c.b16 %v423, %v421
        %v464 = vpack.c.b16 %v426, %v424
        %v465 = vpack.c.b16 %v427, %v425
        %v466 = vpack.c.b16 %v430, %v428
        %v467 = vpack.c.b16 %v431, %v429
        %v468 = vpack.c.b16 %v434, %v432
        %v469 = vpack.c.b16 %v435, %v433
        %v470 = vpack.c.b16 %v438, %v436
        %v471 = vpack.c.b16 %v439, %v437
        %504 = vmatprep.subr.bf16.mxu0 %v441
        %505 = vmatpush1.bf16.msra.mxu0 %v440
        %506 = vmatprep.subr.bf16.mxu0 %v443
        %507 = vmatpush1.bf16.msra.mxu0 %v442
        %508 = vmatprep.subr.bf16.mxu0 %v445
        %509 = vmatpush1.bf16.msra.mxu0 %v444
        %510 = vmatprep.subr.bf16.mxu0 %v447
        %511 = vmatpush1.bf16.msra.mxu0 %v446
        %512 = vmatprep.subr.bf16.mxu0 %v449
        %513 = vmatpush1.bf16.msra.mxu0 %v448
        %514 = vmatprep.subr.bf16.mxu0 %v451
        %515 = vmatpush1.bf16.msra.mxu0 %v450
        %516 = vmatprep.subr.bf16.mxu0 %v453
        %517 = vmatpush1.bf16.msra.mxu0 %v452
        %518 = vmatprep.subr.bf16.mxu0 %v455
        %519 = vmatpush1.bf16.msra.mxu0 %v454
        %520 = vmatprep.subr.bf16.mxu0 %v457
        %521 = vmatpush1.bf16.msra.mxu0 %v456
        %522 = vmatprep.subr.bf16.mxu0 %v459
        %523 = vmatpush1.bf16.msra.mxu0 %v458
        %524 = vmatprep.subr.bf16.mxu0 %v461
        %525 = vmatpush1.bf16.msra.mxu0 %v460
        %526 = vmatprep.subr.bf16.mxu0 %v463
        %527 = vmatpush1.bf16.msra.mxu0 %v462
        %528 = vmatprep.subr.bf16.mxu0 %v465
        %529 = vmatpush1.bf16.msra.mxu0 %v464
        %530 = vmatprep.subr.bf16.mxu0 %v467
        %531 = vmatpush1.bf16.msra.mxu0 %v466
        %532 = vmatprep.subr.bf16.mxu0 %v469
        %533 = vmatpush1.bf16.msra.mxu0 %v468
        %534 = vmatprep.subr.bf16.mxu0 %v471
        %535 = vmatpush1.bf16.msra.mxu0 %v470
        %536 = vmatprep.mubr.bf16.mxu0 %v337
        %537 = vmatmul.mubr.bf16.gmra.mrb[0].mxu0 %v336
        %v538 = vpop.f32.mrb[0].mxu0
        %v539 = vadd.f32 0.0, %v538
        %v540 = vpop.f32.mrb[0].mxu0
        %v541 = vadd.f32 0.0, %v540
        %v542 = vpop.f32.mrb[0].mxu0
        %v543 = vadd.f32 0.0, %v542
        %v544 = vpop.f32.mrb[0].mxu0
        %v545 = vadd.f32 0.0, %v544
        %546 = vmatprep.mubr.bf16.mxu0 %v339
        %547 = vmatmul.mubr.bf16.gmra.mrb[0].mxu0 %v338
        %v548 = vpop.f32.mrb[0].mxu0
        %v549 = vadd.f32 0.0, %v548
        %v550 = vpop.f32.mrb[0].mxu0
        %v551 = vadd.f32 0.0, %v550
        %v552 = vpop.f32.mrb[0].mxu0
        %v553 = vadd.f32 0.0, %v552
        %v554 = vpop.f32.mrb[0].mxu0
        %v555 = vadd.f32 0.0, %v554
        %556 = vdwg.mxu0
        %v557 = vadd.f32 %v280, %v539
        %v558 = vadd.f32 %v281, %v541
        %v559 = vadd.f32 %v282, %v543
        %v560 = vadd.f32 %v283, %v545
        %v561 = vadd.f32 %v284, %v549
        %v562 = vadd.f32 %v285, %v551
        %v563 = vadd.f32 %v286, %v553
        %v564 = vadd.f32 %v287, %v555
        %565 = vst [vmem:[#allocation2] sm:$0xff] %v557
        %566 = vst [vmem:[#allocation2 + $0x8] sm:$0xff] %v558
        %567 = vst [vmem:[#allocation2 + $0x10] sm:$0xff] %v559
        %568 = vst [vmem:[#allocation2 + $0x18] sm:$0xff] %v560
        %569 = vst [vmem:[#allocation2 + $0x20] sm:$0xff] %v561
        %570 = vst [vmem:[#allocation2 + $0x28] sm:$0xff] %v562
        %571 = vst [vmem:[#allocation2 + $0x30] sm:$0xff] %v563
        %572 = vst [vmem:[#allocation2 + $0x38] sm:$0xff] %v564
        // Predicated region
        $region45: #{tpu_custom_call.1} parent=31 // pred_check
          %p573 = pneg %p268
        $region46: #{tpu_custom_call.1} parent=31 // pred_check_branch
          %575 = sbr.rel (%p573) target = $region48
        $region47: #{tpu_custom_call.1} parent=31 // pred_region
          %v576 = vld [vmem:[#allocation2] sm:$0xff]
          %v577 = vld [vmem:[#allocation2 + $0x8] sm:$0xff]
          %v578 = vld [vmem:[#allocation2 + $0x10] sm:$0xff]
          %v579 = vld [vmem:[#allocation2 + $0x18] sm:$0xff]
          %v580 = vld [vmem:[#allocation2 + $0x20] sm:$0xff]
          %v581 = vld [vmem:[#allocation2 + $0x28] sm:$0xff]
          %v582 = vld [vmem:[#allocation2 + $0x30] sm:$0xff]
          %v583 = vld [vmem:[#allocation2 + $0x38] sm:$0xff]
          %v584 = vld [vmem:[%s264] sm:$0x3]
          %v586 = vlaneseq
          %v587 = vshrl.u32 %v586, 7
          %v588 = vsub.s32 0, %v587
          %v589 = vrot.slane %v584, %v588
          %v590 = vlaneseq
          %v591 = vshrl.u32 %v590, 7
          %v592 = vsub.s32 1, %v591
          %v593 = vrot.slane %v584, %v592
          %v596 = vadd.f32 %v576, %v589
          %v597 = vadd.f32 %v577, %v593
          %v598 = vadd.f32 %v578, %v589
          %v599 = vadd.f32 %v579, %v593
          %v600 = vadd.f32 %v580, %v589
          %v601 = vadd.f32 %v581, %v593
          %v602 = vadd.f32 %v582, %v589
          %v603 = vadd.f32 %v583, %v593
          %v604 = vmax.f32 %v596, 0.0
          %v605 = vmax.f32 %v597, 0.0
          %v606 = vmax.f32 %v598, 0.0
          %v607 = vmax.f32 %v599, 0.0
          %v608 = vmax.f32 %v600, 0.0
          %v609 = vmax.f32 %v601, 0.0
          %v610 = vmax.f32 %v602, 0.0
          %v611 = vmax.f32 %v603, 0.0
          %612 = vst [vmem:[%s256] sm:$0xff] %v604
          %613 = vst [vmem:[%s256 + $0x8] sm:$0xff] %v605
          %614 = vst [vmem:[%s256 + $0x10] sm:$0xff] %v606
          %615 = vst [vmem:[%s256 + $0x18] sm:$0xff] %v607
          %616 = vst [vmem:[%s256 + $0x20] sm:$0xff] %v608
          %617 = vst [vmem:[%s256 + $0x28] sm:$0xff] %v609
          %618 = vst [vmem:[%s256 + $0x30] sm:$0xff] %v610
          %619 = vst [vmem:[%s256 + $0x38] sm:$0xff] %v611
        $region48: #{tpu_custom_call.1} parent=31 // pred_fallthru
          _
        %s620 = sand.u32 %s132, 1
        %s621 = scalar_lea.sflag [#allocation5], %s620
        %s622 = sand.u32 %s132, 1
        %s623 = smul.addr %s622, 64
        %s624 = scalar_lea.vmem [#allocation8], %s623
        // Predicated region
        $region49: #{tpu_custom_call.1} parent=31 // pred_check
          %p625 = pneg %p142
        $region50: #{tpu_custom_call.1} parent=31 // pred_check_branch
          %627 = sbr.rel (%p625) target = $region52
        $region51: #{tpu_custom_call.1} parent=31 // pred_region
          %s628 = smul.u32 4, %s26
          %s629 = smul.u32 2, %s27
          %s631 = ssub.s32 1024, 1024
          %632 = vsyncadd %s621, %s631
          %s633 = smul.addr %s628, 2
          %s634 = sadd.s32 %s629, %s633
          %s635 = smul.addr %s634, 128
          %s636 = scalar_lea.hbm %s3, %s635
          %s637 = sshll.u32 %s624, 4
          %s638 = int_to_ptr.vmem [resolvable:$true] %s637
          %643 = dma.vmem_to_hbm [thread:$0]  %s638, 1024, %s636, %s621, 256, 256, 16
        $region52: #{tpu_custom_call.1} parent=31 // pred_fallthru
          _
      $region32: #{tpu_custom_call.1} parent=5 // pred_fallthru
        _
      %p644 = scmp.le.s32.totalorder 2, %s16
      // Predicated region
      $region53: #{tpu_custom_call.1} parent=5 // pred_check
        %p645 = pneg %p644
      $region54: #{tpu_custom_call.1} parent=5 // pred_check_branch
        %647 = sbr.rel (%p645) target = $region56
      $region55: #{tpu_custom_call.1} parent=5 // pred_region
        %s648 = ssub.s32 %s16, 2
        // Predicated region
        $region57: #{tpu_custom_call.1} parent=55 // pred_check
          %p649 = pneg %p148
        $region58: #{tpu_custom_call.1} parent=55 // pred_check_branch
          %651 = sbr.rel (%p649) target = $region60
        $region59: #{tpu_custom_call.1} parent=55 // pred_region
          %s652 = sand.u32 %s133, 1
          %s653 = scalar_lea.sflag [#allocation5], %s652
          %s654 = sand.u32 %s133, 1
          %s655 = smul.addr %s654, 64
          %s656 = scalar_lea.vmem [#allocation8], %s655
          %657 = dma.done %s653, 1024
        $region60: #{tpu_custom_call.1} parent=55 // pred_fallthru
          _
      $region56: #{tpu_custom_call.1} parent=5 // pred_fallthru
        _
    $region6: #{tpu_custom_call.1} parent=1 // loop_footer
      %s20 = sadd.s32 1, %s16
    $region7: #{tpu_custom_call.1} parent=1 // loop_footer_branch
      %15 = sbr.rel target = $region3
    $region8: #{tpu_custom_call.1} parent=1 // loop_exit
      _
    %658 = vsyncpa [#allocation4], 1
    %s659 = scalar_lea.sflag [#allocation4], 1
    %660 = vsyncpa %s659, 1
    %661 = vsyncpa [#allocation7], 1
    %662 = vsyncpa [#allocation5], 1
    %s663 = scalar_lea.sflag [#allocation5], 1
    %664 = vsyncpa %s663, 1

</llo_original>
